<compile_context>
chip_gen: v7x
topology: tpu7x:2x2x1
jax: 0.10.0
libtpu: 0.0.40
codegen_flags: <defaults>
</compile_context>

<pallas_src>
import functools

import jax
import jax.numpy as jnp
from jax.experimental import pallas as pl
from jax.experimental.pallas import tpu as pltpu


def _correct_mlp_kernel(x_ref, o_ref, *, mean):
    # x_ref block: (block_n, F) — block_n samples, each flattened to F = C*H*W.
    x = x_ref[...].astype(jnp.float32)
    mn = jnp.min(x, axis=-1, keepdims=True)   # per-sample min over C,H,W
    mx = jnp.max(x, axis=-1, keepdims=True)   # per-sample max over C,H,W
    # Exact reciprocal on the tiny (block_n, 1) scale keeps ~1e-6 parity with
    # the reference; fused affine keeps the epsilon in the same place.
    inv = 1.0 / (mx - mn + jnp.float32(1e-8))
    y = x * inv - (mn * inv + jnp.float32(mean))
    o_ref[...] = y.astype(o_ref.dtype)


def _choose_block_n(n, row_bytes, target_bytes):
    """Rows per block ≈ target_bytes; multiple of 8 (sublane) unless full extent."""
    max_rows = max(1, target_bytes // max(row_bytes, 1))
    if max_rows >= n:
        return n                      # whole batch in one block (full-extent dim)
    return min(n, max(8, (max_rows // 8) * 8))


def correct_mlp_forward(x, mean, *, target_block_bytes=4 << 20):
    """Pallas implementation of CorrectMLP.forward for NCHW input."""
    assert x.ndim == 4, "expected 4D NCHW input"
    N, C, H, W = x.shape
    F = C * H * W
    x2 = x.reshape(N, F)              # lane-dense flattened layout (free reshape)

    block_n = _choose_block_n(N, F * x2.dtype.itemsize, target_block_bytes)
    grid = (pl.cdiv(N, block_n),)     # per-row math => padded tail rows are harmless

    kernel = functools.partial(_correct_mlp_kernel, mean=float(mean))
    out2 = pl.pallas_call(
        kernel,
        out_shape=jax.ShapeDtypeStruct((N, F), x2.dtype),
        grid=grid,
        in_specs=[pl.BlockSpec((block_n, F), lambda i: (i, 0))],
        out_specs=pl.BlockSpec((block_n, F), lambda i: (i, 0)),
        compiler_params=pltpu.CompilerParams(
            dimension_semantics=("parallel",),   # shard batch tiles across TCs (v7x)
            vmem_limit_bytes=32 * 1024 * 1024,   # explicit; ~4x block fits with margin
        ),
    )(x2)
    return out2.reshape(N, C, H, W)


def correct_mlp_reference(x, mean):
    """Pure-JAX reference matching the PyTorch module."""
    n = x.shape[0]
    flat = x.reshape(n, -1)
    mn = flat.min(axis=1).reshape(-1, 1, 1, 1)
    mx = flat.max(axis=1).reshape(-1, 1, 1, 1)
    return (x - mn) / (mx - mn + 1e-8) - mean


if __name__ == "__main__":
    # Deterministic "parameter": the scalar mean from CorrectMLP.__init__.
    MEAN = 0.5

    key = jax.random.PRNGKey(0)
    x = jax.random.normal(key, (2, 4, 16, 16), dtype=jnp.float32)

    out = correct_mlp_forward(x, MEAN)
    out = jax.block_until_ready(out)

    ref = correct_mlp_reference(x, MEAN)
    assert out.shape == x.shape
    assert jnp.allclose(out, ref, atol=1e-6, rtol=1e-6), "mismatch vs reference"

    print("KERNEL_OK")
</pallas_src>

<mosaic_0001>
module attributes {stable_mosaic.version = 11 : i64} {
  func.func @_correct_mlp_kernel(%arg0: i32, %arg1: memref<2x1024xf32, #tpu.memory_space<vmem>>, %arg2: memref<2x1024xf32, #tpu.memory_space<vmem>>) attributes {dimension_semantics = [#tpu.dimension_semantics<parallel>], iteration_bounds = array<i64: 1>, scalar_prefetch = 0 : i64, scratch_operands = 0 : i64, tpu.core_type = #tpu.core_type<tc>, window_params = [{transform_indices = @transform_0, window_bounds = array<i64: 2, 1024>}, {transform_indices = @transform_1, window_bounds = array<i64: 2, 1024>}]} {
    %c0 = arith.constant 0 : index
    %c0_0 = arith.constant 0 : index
    %0 = vector.load %arg1[%c0, %c0_0] : memref<2x1024xf32, #tpu.memory_space<vmem>>, vector<2x1024xf32>
    %cst = arith.constant dense<0x7F800000> : vector<2xf32>
    %1 = vector.multi_reduction <minimumf>, %0, %cst [1] : vector<2x1024xf32> to vector<2xf32>
    %2 = vector.shape_cast %1 : vector<2xf32> to vector<2x1xf32>
    %cst_1 = arith.constant dense<0xFF800000> : vector<2xf32>
    %3 = vector.multi_reduction <maximumf>, %0, %cst_1 [1] : vector<2x1024xf32> to vector<2xf32>
    %4 = vector.shape_cast %3 : vector<2xf32> to vector<2x1xf32>
    %5 = arith.subf %4, %2 : vector<2x1xf32>
    %cst_2 = arith.constant 9.99999993E-9 : f32
    %6 = vector.broadcast %cst_2 : f32 to vector<2x1xf32>
    %7 = arith.addf %5, %6 : vector<2x1xf32>
    %cst_3 = arith.constant 1.000000e+00 : f32
    %8 = vector.broadcast %cst_3 : f32 to vector<2x1xf32>
    %9 = arith.divf %8, %7 : vector<2x1xf32>
    %10 = vector.broadcast %9 : vector<2x1xf32> to vector<2x1024xf32>
    %11 = arith.mulf %0, %10 : vector<2x1024xf32>
    %12 = arith.mulf %2, %9 : vector<2x1xf32>
    %cst_4 = arith.constant 5.000000e-01 : f32
    %13 = vector.broadcast %cst_4 : f32 to vector<2x1xf32>
    %14 = arith.addf %12, %13 : vector<2x1xf32>
    %15 = vector.broadcast %14 : vector<2x1xf32> to vector<2x1024xf32>
    %16 = arith.subf %11, %15 : vector<2x1024xf32>
    %c0_5 = arith.constant 0 : index
    %c0_6 = arith.constant 0 : index
    %17 = vector.load %arg2[%c0_5, %c0_6] : memref<2x1024xf32, #tpu.memory_space<vmem>>, vector<2x1024xf32>
    tpu.vector_store %arg2[%c0_5, %c0_6], %16 {strides = array<i32>} : memref<2x1024xf32, #tpu.memory_space<vmem>>, vector<2x1024xf32>,
    return
  }
  func.func @transform_0(%arg0: i32) -> (i32, i32) {
    %c0_i32 = arith.constant 0 : i32
    %c0_i32_0 = arith.constant 0 : i32
    return %arg0, %c0_i32 : i32, i32
  }
  func.func @transform_1(%arg0: i32) -> (i32, i32) {
    %c0_i32 = arith.constant 0 : i32
    %c0_i32_0 = arith.constant 0 : i32
    return %arg0, %c0_i32 : i32, i32
  }
}

</mosaic_0001>

<llo_original>
// kernel: tpu_custom_call.1
$region0: #{tpu_custom_call.1}
  #allocation0 [shape = 'u32[]', space=smem, size = 0x4, offset = 0x4, fixed_abs, tag = 'smem constant byte address 0x4 - core index']
  #allocation1 [shape = 'u32[144,128]{1,0:T(1,128)}', space=vmem, size = 0x12000, scoped, tag = 'internal scratch']
  %s0 = inlined_call_operand.hbm [shape: f32[2,1024], index: 0, kind: input, shape index: {}]
  %s1 = inlined_call_operand.hbm [shape: f32[2,1024], index: 1, kind: output, shape index: {}]
  %s2 = sld [smem:[#allocation0]]
  $region18: #{tpu_custom_call.1} parent=0
    _
  %s4 = ssub.s32 1, %s2
  %s5 = scalar_select 0, %s4, %s2
  $region1: #{tpu_custom_call.1} parent=0
    #allocation2 [shape = 'u8[8192]{0}', space=vmem, size = 0x2000, scoped, tag = 'input window, operand 0, single buffered']
    #allocation3 [shape = 's32[1]{0}', space=sflag, size = 0x4, scoped, tag = 'scoped memory for tpu_custom_call.1']
    #allocation4 [shape = 's32[1]{0}', space=sflag, size = 0x4, scoped, tag = 'scoped memory for tpu_custom_call.1']
    #allocation5 [shape = 'u8[8192]{0}', space=vmem, size = 0x2000, scoped, tag = 'output window, operand 0, single buffered']
    %6 = vsyncpa [#allocation3], 0
    %7 = vsyncpa [#allocation4], 0
    // Predicated region
    $region2: #{tpu_custom_call.1} parent=1 // pred_check
      _
    $region3: #{tpu_custom_call.1} parent=1 // pred_check_branch
      %9 = sbr.rel (0) target = $region5
    $region4: #{tpu_custom_call.1} parent=1 // pred_region
      %s11 = ssub.s32 256, 256
      %12 = vsyncadd [#allocation3], %s11
      %s14 = sshll.u32 [#allocation2], 4
      %s15 = int_to_ptr.vmem [resolvable:$true] %s14
      %17 = dma.hbm_to_vmem [thread:$0]  %s0, 256, %s15, [#allocation3]
    $region5: #{tpu_custom_call.1} parent=1 // pred_fallthru
      _
    // Predicated region
    $region6: #{tpu_custom_call.1} parent=1 // pred_check
      _
    $region7: #{tpu_custom_call.1} parent=1 // pred_check_branch
      %19 = sbr.rel (0) target = $region9
    $region8: #{tpu_custom_call.1} parent=1 // pred_region
      %20 = dma.done [#allocation3], 256
    $region9: #{tpu_custom_call.1} parent=1 // pred_fallthru
      _
    %v21 = vld [vmem:[#allocation2] sm:$0xff]
    %v22 = vld [vmem:[#allocation2 + $0x8] sm:$0xff]
    %v25 = vcombine.high %v21, %v21
    %v27 = vunpack.c.l.s4 1983009808
    %v28 = vunpack.c.0.s8 %v27
    %v29 = vlaneseq
    %v30 = vshrl.u32 %v29, 7
    %v31 = vsub.s32 %v28, %v30
    %v32 = vrot.slane %v21, %v31
    %v34 = vunpack.c.l.s4 1983009808
    %v35 = vunpack.c.0.s8 %v34
    %v36 = vlaneseq
    %v37 = vshrl.u32 %v36, 7
    %v38 = vsub.s32 %v35, %v37
    %v39 = vrot.slane %v25, %v38
    %v40 = vcombine.high %v32, %v32
    %v41 = vcombine.high %v39, %v39
    %v42 = vcombine.high %v22, %v22
    %v44 = vunpack.c.l.s4 1983009808
    %v45 = vunpack.c.0.s8 %v44
    %v46 = vlaneseq
    %v47 = vshrl.u32 %v46, 7
    %v48 = vsub.s32 %v45, %v47
    %v49 = vrot.slane %v22, %v48
    %v51 = vunpack.c.l.s4 1983009808
    %v52 = vunpack.c.0.s8 %v51
    %v53 = vlaneseq
    %v54 = vshrl.u32 %v53, 7
    %v55 = vsub.s32 %v52, %v54
    %v56 = vrot.slane %v42, %v55
    %v57 = vcombine.high %v49, %v49
    %v58 = vcombine.high %v56, %v56
    %vm67 = vcmask 1041408
    %v68 = vsel %vm67, %v32, inf
    %v69 = vsel %vm67, %v40, inf
    %v70 = vsel %vm67, %v39, inf
    %v71 = vsel %vm67, %v41, inf
    %v72 = vsel %vm67, %v49, inf
    %v73 = vmin.f32 %v68, %v72
    %v74 = vsel %vm67, %v57, inf
    %v75 = vmin.f32 %v69, %v74
    %v76 = vsel %vm67, %v56, inf
    %v77 = vmin.f32 %v70, %v76
    %v78 = vsel %vm67, %v58, inf
    %v79 = vmin.f32 %v71, %v78
    %v80 = vmin.f32 %v73, %v75
    %v81 = vmin.f32 %v77, %v79
    %v82 = vmin.f32 %v80, %v81
    %83 = vmin.xlane.f32.xlu0 %v82
    %v84 = vpop.xlane.xlu0 %83
    %v85 = vsel %vm67, %v32, -inf
    %v86 = vsel %vm67, %v40, -inf
    %v87 = vsel %vm67, %v39, -inf
    %v88 = vsel %vm67, %v41, -inf
    %v89 = vsel %vm67, %v49, -inf
    %v90 = vmax.f32 %v85, %v89
    %v91 = vsel %vm67, %v57, -inf
    %v92 = vmax.f32 %v86, %v91
    %v93 = vsel %vm67, %v56, -inf
    %v94 = vmax.f32 %v87, %v93
    %v95 = vsel %vm67, %v58, -inf
    %v96 = vmax.f32 %v88, %v95
    %v97 = vmax.f32 %v90, %v92
    %v98 = vmax.f32 %v94, %v96
    %v99 = vmax.f32 %v97, %v98
    %100 = vmax.xlane.f32.xlu0 %v99
    %v101 = vpop.xlane.xlu0 %100
    %v102 = vsub.f32 %v101, %v84
    %v103 = vadd.f32 %v102, 1e-08
    %v104 = vrcp.pop %v103
    %v105 = vmul.f32 1.0, %v104
    %v108 = vunpack.c.l.s4 269488144
    %v109 = vunpack.c.0.s8 %v108
    %v110 = vlaneseq
    %v111 = vshrl.u32 %v110, 7
    %v112 = vsub.s32 %v109, %v111
    %v113 = vrot.slane %v105, %v112
    %v115 = vmul.f32 %v21, %v113
    %v116 = vmul.f32 %v22, %v113
    %v117 = vmul.f32 %v84, %v105
    %v118 = vadd.f32 %v117, 0.5
    %v121 = vunpack.c.l.s4 269488144
    %v122 = vunpack.c.0.s8 %v121
    %v123 = vlaneseq
    %v124 = vshrl.u32 %v123, 7
    %v125 = vsub.s32 %v122, %v124
    %v126 = vrot.slane %v118, %v125
    %v128 = vsub.f32 %v115, %v126
    %v129 = vsub.f32 %v116, %v126
    %130 = vst [vmem:[#allocation5] sm:$0xff] %v128
    %131 = vst [vmem:[#allocation5 + $0x8] sm:$0xff] %v129
    // Predicated region
    $region10: #{tpu_custom_call.1} parent=1 // pred_check
      _
    $region11: #{tpu_custom_call.1} parent=1 // pred_check_branch
      %133 = sbr.rel (0) target = $region13
    $region12: #{tpu_custom_call.1} parent=1 // pred_region
      %s135 = ssub.s32 256, 256
      %136 = vsyncadd [#allocation4], %s135
      %s138 = sshll.u32 [#allocation5], 4
      %s139 = int_to_ptr.vmem [resolvable:$true] %s138
      %141 = dma.vmem_to_hbm [thread:$0]  %s139, 256, %s1, [#allocation4]
    $region13: #{tpu_custom_call.1} parent=1 // pred_fallthru
      _
    // Predicated region
    $region14: #{tpu_custom_call.1} parent=1 // pred_check
      _
    $region15: #{tpu_custom_call.1} parent=1 // pred_check_branch
      %143 = sbr.rel (0) target = $region17
    $region16: #{tpu_custom_call.1} parent=1 // pred_region
      %144 = dma.done [#allocation4], 256
    $region17: #{tpu_custom_call.1} parent=1 // pred_fallthru
      _
    %145 = vsyncpa [#allocation3], 1
    %146 = vsyncpa [#allocation4], 1

</llo_original>
